<compile_context>
chip_gen: v7x
topology: tpu7x:2x2x1
jax: 0.10.0
libtpu: 0.0.40
codegen_flags: <defaults>
</compile_context>

<pallas_src>
import jax
import jax.numpy as jnp
from jax.experimental import pallas as pl
from jax.experimental.pallas import tpu as pltpu


# ---------------------------------------------------------------------------
# Fast path: whole problem in VMEM, single matmul, scalar out via SMEM.
# ---------------------------------------------------------------------------
def _loss_first_small_kernel(yhat_ref, y_ref, out_ref):
    yhat = yhat_ref[...]                                   # (N, D), native dtype
    y = y_ref[...]                                         # (N, N), native dtype
    m = jnp.dot(y, yhat, preferred_element_type=jnp.float32)   # MXU, f32 acc
    out_ref[0, 0] = jnp.sum(yhat.astype(jnp.float32) * m)      # unscaled sum


def _loss_first_small(y_hat, y):
    n, d = y_hat.shape
    isz_h = jnp.dtype(y_hat.dtype).itemsize
    isz_y = jnp.dtype(y.dtype).itemsize
    vmem_need = 2 * (n * n * isz_y + n * d * isz_h) + (1 << 16)
    vmem_limit = int(min(60 << 20, max(vmem_need + (1 << 20), 16 << 20)))
    out = pl.pallas_call(
        _loss_first_small_kernel,
        out_shape=jax.ShapeDtypeStruct((1, 1), jnp.float32),
        in_specs=[
            pl.BlockSpec((n, d), lambda: (0, 0)),   # y_hat resident
            pl.BlockSpec((n, n), lambda: (0, 0)),   # y resident
        ],
        out_specs=pl.BlockSpec(memory_space=pltpu.SMEM),
        compiler_params=pltpu.CompilerParams(vmem_limit_bytes=vmem_limit),
        cost_estimate=pl.CostEstimate(
            flops=2 * n * n * d,
            bytes_accessed=n * n * isz_y + n * d * isz_h + 4,
            transcendentals=0),
    )(y_hat, y)
    return out[0, 0]


# ---------------------------------------------------------------------------
# Tiled path: stream row stripes of y, resident y_hat, per-stripe partials.
# ---------------------------------------------------------------------------
def _loss_first_tiled_kernel(yhat_rows_ref, yhat_full_ref, y_rows_ref, out_ref):
    # (TM, N) @ (N, D) -> (TM, D); native input dtypes, f32 MXU accumulation.
    m = jnp.dot(y_rows_ref[...], yhat_full_ref[...],
                preferred_element_type=jnp.float32)
    # O(TM*D) cast only (never cast the O(TM*N) y stripe).
    partial = jnp.sum(yhat_rows_ref[...].astype(jnp.float32) * m)
    # Lane-dense (1, 8, 128) partial block; wrapper reads [i, 0, 0].
    out_ref[...] = jnp.broadcast_to(partial, out_ref.shape)


def _pick_tm(n, y_itemsize, tm_cap):
    """Largest multiple-of-8 divisor of n with TM*N*itemsize <= ~8 MiB (and <= cap)."""
    if n % 8 != 0:
        return 0
    budget_rows = max(8, (8 << 20) // max(1, n * y_itemsize))
    cap = min(n, tm_cap, budget_rows)
    for cand in range(cap - (cap % 8), 7, -8):
        if n % cand == 0:
            return cand
    return 0


def _loss_first_tiled(y_hat, y, tm):
    n, d = y_hat.shape
    num_tiles = n // tm
    isz_h = jnp.dtype(y_hat.dtype).itemsize
    isz_y = jnp.dtype(y.dtype).itemsize

    # Double-buffered y stripes + resident y_hat (counted 2x to be safe)
    # + y_hat row tiles + output partial blocks.
    vmem_need = (2 * tm * n * isz_y
                 + 2 * n * d * isz_h
                 + 2 * tm * d * isz_h
                 + 2 * 8 * 128 * 4)
    vmem_limit = int(min(60 << 20, max(vmem_need + (4 << 20), 16 << 20)))

    partials = pl.pallas_call(
        _loss_first_tiled_kernel,
        out_shape=jax.ShapeDtypeStruct((num_tiles, 8, 128), jnp.float32),
        grid=(num_tiles,),
        in_specs=[
            pl.BlockSpec((tm, d), lambda i: (i, 0)),   # y_hat row tile (elementwise term)
            pl.BlockSpec((n, d), lambda i: (0, 0)),    # y_hat full (MXU RHS, resident)
            pl.BlockSpec((tm, n), lambda i: (i, 0)),   # y row stripe (streamed, pipelined)
        ],
        out_specs=pl.BlockSpec((1, 8, 128), lambda i: (i, 0, 0)),
        compiler_params=pltpu.CompilerParams(
            dimension_semantics=("parallel",),          # shard stripes across TCs (v7x)
            vmem_limit_bytes=vmem_limit),
        cost_estimate=pl.CostEstimate(
            flops=2 * n * n * d,
            bytes_accessed=n * n * isz_y + 2 * n * d * isz_h
                           + num_tiles * 8 * 128 * 4,
            transcendentals=0),
    )(y_hat, y_hat, y)
    return jnp.sum(partials[:, 0, 0])


# ---------------------------------------------------------------------------
# Public wrapper: matches the PyTorch loss_first forward.
# ---------------------------------------------------------------------------
def loss_first(y_hat, y, alpha, *, tm=None):
    """alpha * 2 * trace(y_hat.T @ y @ y_hat) / y.shape[0]"""
    n, d = y_hat.shape
    assert y.shape == (n, n)
    scale = jnp.float32(float(alpha) * 2.0 / float(n))

    isz_h = jnp.dtype(y_hat.dtype).itemsize
    isz_y = jnp.dtype(y.dtype).itemsize
    small = (n * n * isz_y + n * d * isz_h) < (4 << 20)

    if tm is None:
        if small:
            return scale * _loss_first_small(y_hat, y)
        tm = _pick_tm(n, isz_y, tm_cap=2048)
        if tm == 0:
            # TODO(synk): N not a multiple of 8 with a large y; would need a padded
            # stripe + mask.  Fall back to the single-block path (raised VMEM limit).
            return scale * _loss_first_small(y_hat, y)
    else:
        assert tm % 8 == 0 and n % tm == 0, "tm must be a multiple of 8 dividing N"

    return scale * _loss_first_tiled(y_hat, y, tm)


if __name__ == "__main__":
    key = jax.random.PRNGKey(0)
    k1, k2, k3, k4 = jax.random.split(key, 4)
    alpha = 0.3

    def make_problem(ka, kb, n, d):
        y_hat = jax.random.normal(ka, (n, d), dtype=jnp.float32)
        adj = (jax.random.uniform(kb, (n, n)) < 0.3).astype(jnp.float32)
        adj = adj * (1.0 - jnp.eye(n, dtype=jnp.float32))
        adj = jnp.maximum(adj, adj.T)                  # symmetric adjacency
        lap = jnp.diag(jnp.sum(adj, axis=1)) - adj     # graph Laplacian
        return y_hat, lap.astype(jnp.float32)

    # Small problem (N=16, D=32): single-block fast path.
    yh_s, y_s = make_problem(k1, k2, 16, 32)
    loss_s = jax.block_until_ready(loss_first(yh_s, y_s, alpha))
    ref_s = alpha * 2.0 * jnp.trace(yh_s.T @ y_s @ yh_s) / y_s.shape[0]
    assert jnp.allclose(loss_s, ref_s, rtol=1e-5, atol=1e-5), (loss_s, ref_s)

    # Larger problem (N=512, D=32): row-tiled streaming path (4 stripes of 128 rows).
    yh_l, y_l = make_problem(k3, k4, 512, 32)
    loss_l = jax.block_until_ready(loss_first(yh_l, y_l, alpha, tm=128))
    ref_l = alpha * 2.0 * jnp.trace(yh_l.T @ y_l @ yh_l) / y_l.shape[0]
    assert jnp.allclose(loss_l, ref_l, rtol=5e-4, atol=1e-2), (loss_l, ref_l)

    print("KERNEL_OK")
</pallas_src>

<mosaic_0001>
module attributes {stable_mosaic.version = 11 : i64} {
  func.func @_loss_first_small_kernel(%arg0: memref<16x32xf32, #tpu.memory_space<vmem>>, %arg1: memref<16x16xf32, #tpu.memory_space<vmem>>, %arg2: memref<1x1xf32, #tpu.memory_space<smem>>) attributes {dimension_semantics = [], scalar_prefetch = 0 : i64, scratch_operands = 0 : i64, tpu.core_type = #tpu.core_type<tc>} {
    %c0 = arith.constant 0 : index
    %c0_0 = arith.constant 0 : index
    %0 = vector.load %arg0[%c0, %c0_0] : memref<16x32xf32, #tpu.memory_space<vmem>>, vector<16x32xf32>
    %c0_1 = arith.constant 0 : index
    %c0_2 = arith.constant 0 : index
    %1 = vector.load %arg1[%c0_1, %c0_2] : memref<16x16xf32, #tpu.memory_space<vmem>>, vector<16x16xf32>
    %cst = arith.constant dense<0.000000e+00> : vector<16x32xf32>
    %2 = tpu.matmul %1, %0, %cst {dimension_numbers = #tpu.dot_dimension_numbers<[1], [0], [0], [1], [0, 0, 1, 1], [], []>} : vector<16x16xf32>, vector<16x32xf32>, vector<16x32xf32> -> vector<16x32xf32>
    %3 = arith.mulf %0, %2 : vector<16x32xf32>
    %4 = vector.shape_cast %3 : vector<16x32xf32> to vector<1x16x32xf32>
    %cst_3 = arith.constant dense<0.000000e+00> : vector<1xf32>
    %5 = vector.multi_reduction <add>, %4, %cst_3 [1, 2] : vector<1x16x32xf32> to vector<1xf32>
    %6 = vector.shape_cast %5 : vector<1xf32> to vector<1x1x1xf32>
    %7 = vector.extract %6[0, 0, 0] : f32 from vector<1x1x1xf32>
    %c0_4 = arith.constant 0 : index
    %c0_5 = arith.constant 0 : index
    %8 = memref.load %arg2[%c0_4, %c0_5] : memref<1x1xf32, #tpu.memory_space<smem>>
    memref.store %7, %arg2[%c0_4, %c0_5] : memref<1x1xf32, #tpu.memory_space<smem>>
    return
  }
}

</mosaic_0001>

<llo_original>
// kernel: tpu_custom_call.1
$region0: #{tpu_custom_call.1}
  #allocation0 [shape = 'u32[]', space=smem, size = 0x4, offset = 0x4, fixed_abs, tag = 'smem constant byte address 0x4 - core index']
  #allocation1 [shape = 'u32[144,128]{1,0:T(1,128)}', space=vmem, size = 0x12000, scoped, tag = 'internal scratch']
  %s0 = inlined_call_operand.hbm [shape: f32[16,32], index: 0, kind: input, shape index: {}]
  %s1 = inlined_call_operand.hbm [shape: f32[16,16], index: 1, kind: input, shape index: {}]
  %s2 = inlined_call_operand.hbm [shape: f32[1,1], index: 2, kind: output, shape index: {}]
  %s3 = sld [smem:[#allocation0]]
  $region26: #{tpu_custom_call.1} parent=0
    _
  %s5 = ssub.s32 1, %s3
  %s6 = scalar_select 0, %s5, %s3
  $region1: #{tpu_custom_call.1} parent=0
    #allocation2 [shape = 'u8[8192]{0}', space=vmem, size = 0x2000, scoped, tag = 'input window, operand 0, single buffered']
    #allocation3 [shape = 's32[1]{0}', space=sflag, size = 0x4, scoped, tag = 'scoped memory for tpu_custom_call.1']
    #allocation4 [shape = 's32[1]{0}', space=sflag, size = 0x4, scoped, tag = 'scoped memory for tpu_custom_call.1']
    #allocation5 [shape = 'u8[8192]{0}', space=vmem, size = 0x2000, scoped, tag = 'input window, operand 1, single buffered']
    #allocation6 [shape = 's32[1]{0}', space=sflag, size = 0x4, scoped, tag = 'scoped memory for tpu_custom_call.1']
    #allocation7 [shape = 'u8[512]{0}', space=smem, size = 0x200, scoped, tag = 'output window, operand 0, single buffered']
    %7 = vsyncpa [#allocation3], 0
    %8 = vsyncpa [#allocation6], 0
    %9 = vsyncpa [#allocation4], 0
    // Predicated region
    $region2: #{tpu_custom_call.1} parent=1 // pred_check
      _
    $region3: #{tpu_custom_call.1} parent=1 // pred_check_branch
      %11 = sbr.rel (0) target = $region5
    $region4: #{tpu_custom_call.1} parent=1 // pred_region
      %s13 = ssub.s32 256, 256
      %14 = vsyncadd [#allocation3], %s13
      %s15 = sshll.u32 [#allocation2], 4
      %s16 = int_to_ptr.vmem [resolvable:$true] %s15
      %21 = dma.hbm_to_vmem [thread:$0]  %s0, 256, %s16, [#allocation3], 128, 128, 8
    $region5: #{tpu_custom_call.1} parent=1 // pred_fallthru
      _
    // Predicated region
    $region6: #{tpu_custom_call.1} parent=1 // pred_check
      _
    $region7: #{tpu_custom_call.1} parent=1 // pred_check_branch
      %23 = sbr.rel (0) target = $region9
    $region8: #{tpu_custom_call.1} parent=1 // pred_region
      %s25 = ssub.s32 256, 256
      %26 = vsyncadd [#allocation6], %s25
      %s27 = sshll.u32 [#allocation5], 4
      %s28 = int_to_ptr.vmem [resolvable:$true] %s27
      %33 = dma.hbm_to_vmem [thread:$0]  %s1, 256, %s28, [#allocation6], 128, 128, 8
    $region9: #{tpu_custom_call.1} parent=1 // pred_fallthru
      _
    // Predicated region
    $region10: #{tpu_custom_call.1} parent=1 // pred_check
      _
    $region11: #{tpu_custom_call.1} parent=1 // pred_check_branch
      %35 = sbr.rel (0) target = $region13
    $region12: #{tpu_custom_call.1} parent=1 // pred_region
      %36 = dma.done [#allocation3], 256
    $region13: #{tpu_custom_call.1} parent=1 // pred_fallthru
      _
    // Predicated region
    $region14: #{tpu_custom_call.1} parent=1 // pred_check
      _
    $region15: #{tpu_custom_call.1} parent=1 // pred_check_branch
      %38 = sbr.rel (0) target = $region17
    $region16: #{tpu_custom_call.1} parent=1 // pred_region
      %39 = dma.done [#allocation6], 256
    $region17: #{tpu_custom_call.1} parent=1 // pred_fallthru
      _
    %v40 = vld [vmem:[#allocation2] sm:$0xff]
    %v41 = vld [vmem:[#allocation2 + $0x8] sm:$0xff]
    %v42 = vld [vmem:[#allocation5] sm:$0xff]
    %v43 = vld [vmem:[#allocation5 + $0x8] sm:$0xff]
    %vm44 = vcmask 130048
    %v46 = vsel %vm44, %v42, 0
    %v49 = vsel %vm44, %v43, 0
    %51 = vmatprep.subr.mxu0 0.0
    %52 = vmatpush1.msra.mxu0 %v40
    %53 = vmatprep.subr.mxu0 0.0
    %54 = vmatpush1.msra.mxu0 %v41
    %55 = vmatprep.subr.mxu0 0.0
    %56 = vmatpush1.msra.mxu0 0.0
    %57 = vmatprep.subr.mxu0 0.0
    %58 = vmatpush1.msra.mxu0 0.0
    %59 = vmatprep.subr.mxu0 0.0
    %60 = vmatpush1.msra.mxu0 0.0
    %61 = vmatprep.subr.mxu0 0.0
    %62 = vmatpush1.msra.mxu0 0.0
    %63 = vmatprep.subr.mxu0 0.0
    %64 = vmatpush1.msra.mxu0 0.0
    %65 = vmatprep.subr.mxu0 0.0
    %66 = vmatpush1.msra.mxu0 0.0
    %67 = vmatprep.subr.mxu0 0.0
    %68 = vmatpush1.msra.mxu0 0.0
    %69 = vmatprep.subr.mxu0 0.0
    %70 = vmatpush1.msra.mxu0 0.0
    %71 = vmatprep.subr.mxu0 0.0
    %72 = vmatpush1.msra.mxu0 0.0
    %73 = vmatprep.subr.mxu0 0.0
    %74 = vmatpush1.msra.mxu0 0.0
    %75 = vmatprep.subr.mxu0 0.0
    %76 = vmatpush1.msra.mxu0 0.0
    %77 = vmatprep.subr.mxu0 0.0
    %78 = vmatpush1.msra.mxu0 0.0
    %79 = vmatprep.subr.mxu0 0.0
    %80 = vmatpush1.msra.mxu0 0.0
    %81 = vmatprep.subr.mxu0 0.0
    %82 = vmatpush1.msra.mxu0 0.0
    %83 = vmatprep.subr.mxu0 0.0
    %84 = vmatpush1.msra.mxu0 0.0
    %85 = vmatprep.subr.mxu0 0.0
    %86 = vmatpush1.msra.mxu0 0.0
    %87 = vmatprep.subr.mxu0 0.0
    %88 = vmatpush1.msra.mxu0 0.0
    %89 = vmatprep.subr.mxu0 0.0
    %90 = vmatpush1.msra.mxu0 0.0
    %91 = vmatprep.subr.mxu0 0.0
    %92 = vmatpush1.msra.mxu0 0.0
    %93 = vmatprep.subr.mxu0 0.0
    %94 = vmatpush1.msra.mxu0 0.0
    %95 = vmatprep.subr.mxu0 0.0
    %96 = vmatpush1.msra.mxu0 0.0
    %97 = vmatprep.subr.mxu0 0.0
    %98 = vmatpush1.msra.mxu0 0.0
    %99 = vmatprep.subr.mxu0 0.0
    %100 = vmatpush1.msra.mxu0 0.0
    %101 = vmatprep.subr.mxu0 0.0
    %102 = vmatpush1.msra.mxu0 0.0
    %103 = vmatprep.subr.mxu0 0.0
    %104 = vmatpush1.msra.mxu0 0.0
    %105 = vmatprep.subr.mxu0 0.0
    %106 = vmatpush1.msra.mxu0 0.0
    %107 = vmatprep.subr.mxu0 0.0
    %108 = vmatpush1.msra.mxu0 0.0
    %109 = vmatprep.subr.mxu0 0.0
    %110 = vmatpush1.msra.mxu0 0.0
    %111 = vmatprep.subr.mxu0 0.0
    %112 = vmatpush1.msra.mxu0 0.0
    %113 = vmatprep.subr.mxu0 0.0
    %114 = vmatpush1.msra.mxu0 0.0
    %115 = vmatprep.mubr.f32.mxu0 0.0
    %116 = vmatmul.mubr.f32.gmra.mrb[0].mxu0 %v46
    %v117 = vpop.f32.mrb[0].mxu0
    %v118 = vadd.f32 0.0, %v117
    %v119 = vpop.f32.mrb[0].mxu0
    %120 = vmatprep.mubr.f32.mxu0 0.0
    %121 = vmatmul.mubr.f32.gmra.mrb[0].mxu0 %v49
    %v122 = vpop.f32.mrb[0].mxu0
    %v123 = vadd.f32 0.0, %v122
    %v124 = vpop.f32.mrb[0].mxu0
    %125 = vdwg.mxu0
    %v126 = vmul.f32 %v40, %v118
    %v127 = vmul.f32 %v41, %v123
    %vm128 = vcmask 261120
    %v129 = vsel %vm128, %v126, 0.0
    %v130 = vsel %vm128, %v127, 0.0
    %v131 = vadd.f32 %v129, %v130
    %132 = vadd.xlane.f32.xlu0 %v131
    %v133 = vpop.xlane.xlu0 %132
    %v134 = vrot.slane %v133, 4
    %v135 = vadd.f32 %v133, %v134
    %v136 = vrot.slane %v135, 2
    %v137 = vadd.f32 %v135, %v136
    %v138 = vrot.slane %v137, 1
    %v139 = vadd.f32 %v137, %v138
    %s140 = vtos %v139
    %s141 = scalar_lea.smem [#allocation7], 0
    %142 = sst [smem:[%s141]] %s140
    // Predicated region
    $region18: #{tpu_custom_call.1} parent=1 // pred_check
      _
    $region19: #{tpu_custom_call.1} parent=1 // pred_check_branch
      %144 = sbr.rel (0) target = $region21
    $region20: #{tpu_custom_call.1} parent=1 // pred_region
      %s146 = ssub.s32 16, 16
      %147 = vsyncadd [#allocation4], %s146
      %150 = dma.smem_to_hbm [#allocation7], 16, %s2, [#allocation4]
    $region21: #{tpu_custom_call.1} parent=1 // pred_fallthru
      _
    // Predicated region
    $region22: #{tpu_custom_call.1} parent=1 // pred_check
      _
    $region23: #{tpu_custom_call.1} parent=1 // pred_check_branch
      %152 = sbr.rel (0) target = $region25
    $region24: #{tpu_custom_call.1} parent=1 // pred_region
      %153 = dma.done [#allocation4], 16
    $region25: #{tpu_custom_call.1} parent=1 // pred_fallthru
      _
    %154 = sfence
    %155 = vsyncpa [#allocation3], 1
    %156 = vsyncpa [#allocation6], 1
    %157 = vsyncpa [#allocation4], 1

</llo_original>
